<compile_context>
chip_gen: v6e
topology: v6e:2x2x1
jax: 0.10.0
libtpu: 0.0.40
codegen_flags: <defaults>
</compile_context>

<pallas_src>
import functools
import math

import numpy as np
import jax
import jax.numpy as jnp
from jax.experimental import pallas as pl
from jax.experimental.pallas import tpu as pltpu


_VMEM_LIMIT = 48 * 1024 * 1024          # fits v7x (64 MiB physical) and below
_RESIDENT_MAX_BYTES = 4 * 1024 * 1024   # weight-resident matmul threshold
_TM = 512                               # matmul M tile


# --------------------------------------------------------------------------
# small helpers
# --------------------------------------------------------------------------

def _round_up(x, m):
    return (x + m - 1) // m * m


def _cparams(semantics):
    return pltpu.CompilerParams(dimension_semantics=semantics,
                                vmem_limit_bytes=_VMEM_LIMIT)


# --------------------------------------------------------------------------
# Pallas kernels
# --------------------------------------------------------------------------

def _mm_resident_kernel(*refs, relu, has_res):
    """Weight-resident matmul: whole (K,N) weight in VMEM, one dot per step.

    out = [relu]( A @ B + bias [+ res] ),  f32 accumulate, cast on store.
    """
    if has_res:
        a_ref, b_ref, bias_ref, res_ref, o_ref = refs
    else:
        a_ref, b_ref, bias_ref, o_ref = refs
        res_ref = None
    acc = jnp.dot(a_ref[...], b_ref[...], preferred_element_type=jnp.float32)
    acc = acc + bias_ref[...]
    if res_ref is not None:
        acc = acc + res_ref[...].astype(jnp.float32)
    if relu:
        acc = jnp.maximum(acc, 0.0)
    o_ref[...] = acc.astype(o_ref.dtype)


def _mm_ktiled_kernel(*refs, relu, has_res):
    """M/N/K-tiled matmul: bias folded into the k==0 accumulator init,
    residual + ReLU + cast fused into the last-k epilogue."""
    if has_res:
        a_ref, b_ref, bias_ref, res_ref, o_ref, acc_ref = refs
    else:
        a_ref, b_ref, bias_ref, o_ref, acc_ref = refs
        res_ref = None

    @pl.when(pl.program_id(2) == 0)
    def _():
        acc_ref[...] = jnp.broadcast_to(bias_ref[...], acc_ref.shape)

    acc_ref[...] += jnp.dot(a_ref[...], b_ref[...],
                            preferred_element_type=jnp.float32)

    @pl.when(pl.program_id(2) == pl.num_programs(2) - 1)
    def _():
        r = acc_ref[...]
        if res_ref is not None:
            r = r + res_ref[...].astype(jnp.float32)
        if relu:
            r = jnp.maximum(r, 0.0)
        o_ref[...] = r.astype(o_ref.dtype)


def _max3_kernel(a_ref, b_ref, c_ref, o_ref):
    o_ref[...] = jnp.maximum(jnp.maximum(a_ref[...], b_ref[...]), c_ref[...])


def _argmax_kernel(x_ref, o_ref):
    """x:(1, C, bh, W) f32 -> (1, bh, W) int32 first-max channel index."""
    x = x_ref[...]
    c = x.shape[1]
    m = jnp.max(x, axis=1, keepdims=True)
    iota = jax.lax.broadcasted_iota(jnp.int32, x.shape, 1)
    o_ref[...] = jnp.min(jnp.where(x == m, iota, c), axis=1)


# --------------------------------------------------------------------------
# Pallas wrappers
# --------------------------------------------------------------------------

def matmul_bias(a, b, bias, *, relu=False, res=None, out_dtype=jnp.bfloat16):
    """a:(M,K) @ b:(K,N) + bias:(1,N) f32 [+ res:(M,N)], optional ReLU.

    b (the weight) must already be padded/reshaped at init time; no padding or
    slicing happens here (ragged M is handled via cdiv grids + partial blocks).
    """
    M, K = a.shape
    Kb, N = b.shape
    assert K == Kb and bias.shape == (1, N)
    if a.dtype != b.dtype:
        a = a.astype(b.dtype)

    tm = min(_TM, _round_up(M, 16))
    has_res = res is not None
    wbytes = K * N * b.dtype.itemsize

    if wbytes <= _RESIDENT_MAX_BYTES:
        # Weight-resident: weight & bias DMA'd exactly once, M-only grid.
        in_specs = [pl.BlockSpec((tm, K), lambda i: (i, 0)),
                    pl.BlockSpec((K, N), lambda i: (0, 0)),
                    pl.BlockSpec((1, N), lambda i: (0, 0))]
        args = [a, b, bias]
        if has_res:
            in_specs.append(pl.BlockSpec((tm, N), lambda i: (i, 0)))
            args.append(res)
        return pl.pallas_call(
            functools.partial(_mm_resident_kernel, relu=relu, has_res=has_res),
            out_shape=jax.ShapeDtypeStruct((M, N), out_dtype),
            grid_spec=pltpu.PrefetchScalarGridSpec(
                num_scalar_prefetch=0,
                grid=(pl.cdiv(M, tm),),
                in_specs=in_specs,
                out_specs=pl.BlockSpec((tm, N), lambda i: (i, 0)),
            ),
            compiler_params=_cparams(("parallel",)),
        )(*args)

    # K-tiled path (large weights: layer4 3x3 convs, head_conv1).
    assert K % 128 == 0 and N % 128 == 0, (K, N)
    tk = 512 if K % 512 == 0 else (256 if K % 256 == 0 else 128)
    tn = 512 if N % 512 == 0 else (256 if N % 256 == 0 else 128)
    in_specs = [pl.BlockSpec((tm, tk), lambda i, j, k: (i, k)),
                pl.BlockSpec((tk, tn), lambda i, j, k: (k, j)),
                pl.BlockSpec((1, tn), lambda i, j, k: (0, j))]
    args = [a, b, bias]
    if has_res:
        in_specs.append(pl.BlockSpec((tm, tn), lambda i, j, k: (i, j)))
        args.append(res)
    return pl.pallas_call(
        functools.partial(_mm_ktiled_kernel, relu=relu, has_res=has_res),
        out_shape=jax.ShapeDtypeStruct((M, N), out_dtype),
        grid_spec=pltpu.PrefetchScalarGridSpec(
            num_scalar_prefetch=0,
            grid=(pl.cdiv(M, tm), N // tn, K // tk),
            in_specs=in_specs,
            out_specs=pl.BlockSpec((tm, tn), lambda i, j, k: (i, j)),
            scratch_shapes=[pltpu.VMEM((tm, tn), jnp.float32)],
        ),
        compiler_params=_cparams(("parallel", "parallel", "arbitrary")),
    )(*args)


@functools.partial(jax.jit, static_argnames=(
    "kh", "kw", "stride", "padding", "dilation", "relu", "out_dtype"))
def conv2d(x, w, b, residual=None, *, kh, kw, stride=1, padding=0,
           dilation=1, relu=False, out_dtype=jnp.bfloat16):
    """x:(N,H,W,Cin_p) bf16, w:(kh*kw*Cin_p, Cout_p) bf16, b:(1,Cout_p) f32.

    1x1 convs feed the activation straight to the matmul (free reshape);
    kxk convs build bf16 im2col patches (XLA glue fused under this jit).
    Optional `residual` (same shape as the output) is added before the ReLU
    inside the matmul epilogue.
    """
    N, H, W, Cin = x.shape
    Ho = (H + 2 * padding - dilation * (kh - 1) - 1) // stride + 1
    Wo = (W + 2 * padding - dilation * (kw - 1) - 1) // stride + 1

    if kh == 1 and kw == 1 and padding == 0:
        xs = x[:, ::stride, ::stride, :] if stride > 1 else x
        a = xs.reshape(N * Ho * Wo, Cin)
    else:
        xp = jnp.pad(x, ((0, 0), (padding, padding), (padding, padding),
                         (0, 0)))
        patches = []
        for di in range(kh):
            for dj in range(kw):
                hs = di * dilation
                ws = dj * dilation
                patches.append(
                    xp[:, hs:hs + stride * (Ho - 1) + 1:stride,
                          ws:ws + stride * (Wo - 1) + 1:stride, :])
        a = jnp.concatenate(patches, axis=-1).reshape(
            N * Ho * Wo, kh * kw * Cin)

    res2d = None if residual is None else residual.reshape(N * Ho * Wo, -1)
    y = matmul_bias(a, w, b, relu=relu, res=res2d, out_dtype=out_dtype)
    return y.reshape(N, Ho, Wo, w.shape[1])


@jax.jit
def maxpool_3x3_s2_p1(x):
    """3x3/2 max-pool, padding 1: XLA W-direction 3-tap max (fused) then a
    row-tiled Pallas 3-tap max along H."""
    N, H, W, C = x.shape
    Ho = (H + 2 - 3) // 2 + 1
    Wo = (W + 2 - 3) // 2 + 1
    xp = jnp.pad(x, ((0, 0), (1, 1), (1, 1), (0, 0)),
                 constant_values=-jnp.inf)
    cm = jnp.maximum(jnp.maximum(xp[:, :, 0:2 * Wo - 1:2, :],
                                 xp[:, :, 1:2 * Wo:2, :]),
                     xp[:, :, 2:2 * Wo + 1:2, :])            # (N, H+2, Wo, C)
    r0 = cm[:, 0:2 * Ho - 1:2].reshape(-1, C)
    r1 = cm[:, 1:2 * Ho:2].reshape(-1, C)
    r2 = cm[:, 2:2 * Ho + 1:2].reshape(-1, C)

    M = N * Ho * Wo
    br = max(8, min((2 << 20) // (C * x.dtype.itemsize) // 8 * 8,
                    _round_up(M, 8)))
    out = pl.pallas_call(
        _max3_kernel,
        out_shape=jax.ShapeDtypeStruct((M, C), x.dtype),
        grid_spec=pltpu.PrefetchScalarGridSpec(
            num_scalar_prefetch=0,
            grid=(pl.cdiv(M, br),),
            in_specs=[pl.BlockSpec((br, C), lambda i: (i, 0))] * 3,
            out_specs=pl.BlockSpec((br, C), lambda i: (i, 0)),
        ),
        compiler_params=_cparams(("parallel",)),
    )(r0, r1, r2)
    return out.reshape(N, Ho, Wo, C)


def _bilinear_taps(out_size, in_size):
    """Source indices/weights matching F.interpolate(align_corners=False)."""
    i0 = np.zeros((out_size,), np.int32)
    i1 = np.zeros((out_size,), np.int32)
    w1 = np.zeros((out_size,), np.float32)
    if in_size == 1:
        return i0, i1, w1
    scale = in_size / out_size
    for i in range(out_size):
        src = max((i + 0.5) * scale - 0.5, 0.0)
        lo = min(int(math.floor(src)), in_size - 1)
        hi = min(lo + 1, in_size - 1)
        i0[i], i1[i], w1[i] = lo, hi, src - lo
    return i0, i1, w1


@functools.partial(jax.jit, static_argnames=("out_hw", "num_classes"))
def upsample_argmax(y, *, out_hw, num_classes=21):
    """y:(N,h,w,Cp) f32 logits (first `num_classes` real) -> (N,H,W) int32.

    Bilinear upsample (align_corners=False): H-lerp on the small OS-8 map,
    W-lerp as a tiny f32 interpolation matmul, channel argmax fused in a
    lane-dense Pallas pass.
    """
    N, h, w, _ = y.shape
    H, W = out_hw
    C = num_classes

    i0h, i1h, wh = _bilinear_taps(H, h)
    i0w, i1w, ww = _bilinear_taps(W, w)

    # H-direction lerp on the low-resolution map, channels-major layout.
    yt = jnp.transpose(y[..., :C], (0, 3, 1, 2))               # (N,C,h,w)
    y0 = yt[:, :, i0h, :]
    y1 = yt[:, :, i1h, :]
    mid = y0 + (y1 - y0) * jnp.asarray(wh).reshape(1, 1, H, 1)  # (N,C,H,w)

    # W-direction lerp as an interpolation matmul (two taps per output col).
    g = np.zeros((w, W), np.float32)
    cols = np.arange(W)
    g[i0w, cols] += 1.0 - ww
    g[i1w, cols] += ww
    full = matmul_bias(mid.reshape(N * C * H, w), jnp.asarray(g),
                       jnp.zeros((1, W), jnp.float32),
                       relu=False, out_dtype=jnp.float32)
    full = full.reshape(N, C, H, W)

    # Fused channel argmax (first-max tie-break), int32 rows.
    bh = min(H, 64)
    return pl.pallas_call(
        _argmax_kernel,
        out_shape=jax.ShapeDtypeStruct((N, H, W), jnp.int32),
        grid_spec=pltpu.PrefetchScalarGridSpec(
            num_scalar_prefetch=0,
            grid=(N, pl.cdiv(H, bh)),
            in_specs=[pl.BlockSpec((1, C, bh, W), lambda n, i: (n, 0, i, 0))],
            out_specs=pl.BlockSpec((1, bh, W), lambda n, i: (n, i, 0)),
        ),
        compiler_params=_cparams(("parallel", "parallel")),
    )(full)


# --------------------------------------------------------------------------
# Parameter construction (deterministic synthetic weights, BN folded,
# weights pre-padded to lane-aligned (Kp, Np) bf16 matrices at init)
# --------------------------------------------------------------------------

def init_fcn_resnet101_params(key):
    counter = [0]

    def next_key():
        counter[0] += 1
        return jax.random.fold_in(key, counter[0])

    def make_conv(cin, cout, k, cin_p, *, bn=True):
        fan_in = k * k * cin
        if bn:
            w = jax.random.normal(next_key(), (k, k, cin, cout),
                                  jnp.float32) * math.sqrt(2.0 / fan_in)
            gamma = jnp.ones((cout,), jnp.float32)
            beta = jnp.zeros((cout,), jnp.float32)
            mean = jnp.zeros((cout,), jnp.float32)
            var = jnp.ones((cout,), jnp.float32)
            scale = gamma / jnp.sqrt(var + 1e-5)        # fold eval-mode BN
            w = w * scale
            b = beta - mean * scale
        else:
            w = jax.random.normal(next_key(), (k, k, cin, cout),
                                  jnp.float32) * math.sqrt(1.0 / fan_in)
            b = jax.random.normal(next_key(), (cout,), jnp.float32) * 0.01
        cout_p = _round_up(cout, 128)
        wp = jnp.pad(w, ((0, 0), (0, 0), (0, cin_p - cin), (0, cout_p - cout)))
        bp = jnp.pad(b, (0, cout_p - cout))
        return {"w": wp.reshape(k * k * cin_p, cout_p).astype(jnp.bfloat16),
                "b": bp.reshape(1, cout_p), "kh": k, "kw": k}

    def conv_bn(cin, cout, k):
        return make_conv(cin, cout, k, _round_up(cin, 128), bn=True)

    params = {"stem": make_conv(3, 64, 7, 4, bn=True)}   # input padded to 4ch

    # ResNet-101 with replace_stride_with_dilation=[False, True, True]
    layer_defs = [(64, 3, 1, False), (128, 4, 2, False),
                  (256, 23, 2, True), (512, 3, 2, True)]
    inplanes, dilation = 64, 1
    layers, cfg = [], []
    for planes, blocks, stride, dilate in layer_defs:
        prev_dil = dilation
        if dilate:
            dilation *= stride
            stride = 1
        block_params, block_cfg = [], []
        first = {"conv1": conv_bn(inplanes, planes, 1),
                 "conv2": conv_bn(planes, planes, 3),
                 "conv3": conv_bn(planes, planes * 4, 1)}
        if stride != 1 or inplanes != planes * 4:
            first["down"] = conv_bn(inplanes, planes * 4, 1)
        block_params.append(first)
        block_cfg.append((stride, prev_dil))
        inplanes = planes * 4
        for _ in range(1, blocks):
            block_params.append({"conv1": conv_bn(inplanes, planes, 1),
                                 "conv2": conv_bn(planes, planes, 3),
                                 "conv3": conv_bn(planes, planes * 4, 1)})
            block_cfg.append((1, dilation))
        layers.append(block_params)
        cfg.append(tuple(block_cfg))
    params["layers"] = layers

    # FCNHead(2048, 21): 3x3 conv(no bias)+BN+ReLU, Dropout(identity), 1x1 conv
    params["head_conv1"] = conv_bn(2048, 512, 3)
    params["head_conv2"] = make_conv(512, 21, 1, 512, bn=False)
    return params, tuple(cfg)


# --------------------------------------------------------------------------
# Forward pass
# --------------------------------------------------------------------------

def bottleneck_forward(x, bp, stride, dil):
    c1, c2, c3 = bp["conv1"], bp["conv2"], bp["conv3"]
    out = conv2d(x, c1["w"], c1["b"], kh=c1["kh"], kw=c1["kw"], relu=True)
    out = conv2d(out, c2["w"], c2["b"], kh=c2["kh"], kw=c2["kw"],
                 stride=stride, padding=dil, dilation=dil, relu=True)
    if "down" in bp:
        d = bp["down"]
        identity = conv2d(x, d["w"], d["b"], kh=d["kh"], kw=d["kw"],
                          stride=stride, relu=False)
    else:
        identity = x
    # conv3 + residual add + ReLU fused in the matmul epilogue.
    return conv2d(out, c3["w"], c3["b"], identity,
                  kh=c3["kh"], kw=c3["kw"], relu=True)


def fcn_resnet101_forward(params, cfg, x_nchw):
    N, _, H_in, W_in = x_nchw.shape
    # NCHW -> NHWC, pad 3 input channels to 4, bf16 activations throughout.
    x = jnp.transpose(x_nchw, (0, 2, 3, 1))
    x = jnp.pad(x, ((0, 0), (0, 0), (0, 0), (0, 1))).astype(jnp.bfloat16)

    # Stem: 7x7/2 conv + BN + ReLU, 3x3/2 maxpool
    p = params["stem"]
    x = conv2d(x, p["w"], p["b"], kh=p["kh"], kw=p["kw"],
               stride=2, padding=3, relu=True)
    x = maxpool_3x3_s2_p1(x)

    # Backbone layers
    for layer_p, layer_c in zip(params["layers"], cfg):
        for bp, (stride, dil) in zip(layer_p, layer_c):
            x = bottleneck_forward(x, bp, stride, dil)

    # FCN head (Dropout is identity in eval mode)
    p = params["head_conv1"]
    y = conv2d(x, p["w"], p["b"], kh=p["kh"], kw=p["kw"], padding=1, relu=True)
    p = params["head_conv2"]
    y = conv2d(y, p["w"], p["b"], kh=p["kh"], kw=p["kw"], relu=False,
               out_dtype=jnp.float32)                     # (N, h, w, 128) f32

    # Bilinear upsample to input resolution + channel argmax (fused).
    idx = upsample_argmax(y, out_hw=(H_in, W_in))         # (N, H, W) int32
    return idx[:, None, :, :]                             # (N, 1, H, W)


# --------------------------------------------------------------------------

if __name__ == "__main__":
    key = jax.random.PRNGKey(0)
    params, cfg = init_fcn_resnet101_params(key)

    # Small deterministic input: batch=2, RGB, 32x32 (NCHW like PyTorch).
    x = jax.random.normal(jax.random.fold_in(key, 999), (2, 3, 32, 32),
                          jnp.float32)

    out = fcn_resnet101_forward(params, cfg, x)
    out = jax.block_until_ready(out)
    assert out.shape == (2, 1, 32, 32), out.shape
    assert out.dtype == jnp.int32
    print("KERNEL_OK")
</pallas_src>

<mosaic_0001>
module attributes {stable_mosaic.version = 11 : i64} {
  func.func @_mm_resident_kernel(%arg0: i32, %arg1: memref<512x196xbf16, #tpu.memory_space<vmem>>, %arg2: memref<196x128xbf16, #tpu.memory_space<vmem>>, %arg3: memref<1x128xf32, #tpu.memory_space<vmem>>, %arg4: memref<512x128xbf16, #tpu.memory_space<vmem>>) attributes {dimension_semantics = [#tpu.dimension_semantics<parallel>], iteration_bounds = array<i64: 1>, scalar_prefetch = 0 : i64, scratch_operands = 0 : i64, tpu.core_type = #tpu.core_type<tc>, window_params = [{transform_indices = @transform_0, window_bounds = array<i64: 512, 196>}, {pipeline_mode = #tpu.pipeline_mode<synchronous>, transform_indices = @transform_1, window_bounds = array<i64: 196, 128>}, {pipeline_mode = #tpu.pipeline_mode<synchronous>, transform_indices = @transform_2, window_bounds = array<i64: 1, 128>}, {transform_indices = @transform_3, window_bounds = array<i64: 512, 128>}]} {
    %c0 = arith.constant 0 : index
    %c0_0 = arith.constant 0 : index
    %0 = vector.load %arg1[%c0, %c0_0] : memref<512x196xbf16, #tpu.memory_space<vmem>>, vector<512x196xbf16>
    %c0_1 = arith.constant 0 : index
    %c0_2 = arith.constant 0 : index
    %1 = vector.load %arg2[%c0_1, %c0_2] : memref<196x128xbf16, #tpu.memory_space<vmem>>, vector<196x128xbf16>
    %cst = arith.constant dense<0.000000e+00> : vector<512x128xf32>
    %2 = tpu.matmul %0, %1, %cst {dimension_numbers = #tpu.dot_dimension_numbers<[1], [0], [0], [1], [0, 0, 1, 1], [], []>} : vector<512x196xbf16>, vector<196x128xbf16>, vector<512x128xf32> -> vector<512x128xf32>
    %c0_3 = arith.constant 0 : index
    %c0_4 = arith.constant 0 : index
    %3 = vector.load %arg3[%c0_3, %c0_4] : memref<1x128xf32, #tpu.memory_space<vmem>>, vector<1x128xf32>
    %4 = vector.broadcast %3 : vector<1x128xf32> to vector<512x128xf32>
    %5 = arith.addf %2, %4 : vector<512x128xf32>
    %cst_5 = arith.constant 0.000000e+00 : f32
    %6 = vector.broadcast %cst_5 : f32 to vector<512x128xf32>
    %7 = arith.maximumf %5, %6 : vector<512x128xf32>
    %8 = arith.truncf %7 : vector<512x128xf32> to vector<512x128xbf16>
    %c0_6 = arith.constant 0 : index
    %c0_7 = arith.constant 0 : index
    %9 = vector.load %arg4[%c0_6, %c0_7] : memref<512x128xbf16, #tpu.memory_space<vmem>>, vector<512x128xbf16>
    tpu.vector_store %arg4[%c0_6, %c0_7], %8 {strides = array<i32>} : memref<512x128xbf16, #tpu.memory_space<vmem>>, vector<512x128xbf16>,
    return
  }
  func.func @transform_0(%arg0: i32) -> (i32, i32) {
    %c0_i32 = arith.constant 0 : i32
    %c0_i32_0 = arith.constant 0 : i32
    return %arg0, %c0_i32 : i32, i32
  }
  func.func @transform_1(%arg0: i32) -> (i32, i32) {
    %c0_i32 = arith.constant 0 : i32
    %c0_i32_0 = arith.constant 0 : i32
    %c0_i32_1 = arith.constant 0 : i32
    return %c0_i32, %c0_i32_0 : i32, i32
  }
  func.func @transform_2(%arg0: i32) -> (i32, i32) {
    %c0_i32 = arith.constant 0 : i32
    %c0_i32_0 = arith.constant 0 : i32
    %c0_i32_1 = arith.constant 0 : i32
    return %c0_i32, %c0_i32_0 : i32, i32
  }
  func.func @transform_3(%arg0: i32) -> (i32, i32) {
    %c0_i32 = arith.constant 0 : i32
    %c0_i32_0 = arith.constant 0 : i32
    return %arg0, %c0_i32 : i32, i32
  }
}

</mosaic_0001>

<llo_original>
// kernel: conv2d.1
$region0: #{conv2d.1}
  #allocation0 [shape = 'u32[]', space=smem, size = 0x4, offset = 0x4, fixed_abs, tag = 'smem constant byte address 0x4 - core index']
  #allocation1 [shape = 'u32[144,128]{1,0:T(1,128)}', space=vmem, size = 0x12000, scoped, tag = 'internal scratch']
  %s0 = inlined_call_operand.vmem [shape: bf16[512,196], index: 0, kind: input, shape index: {}]
  %s1 = inlined_call_operand.vmem [shape: bf16[196,128], index: 1, kind: input, shape index: {}]
  %s2 = inlined_call_operand.vmem [shape: f32[1,128], index: 2, kind: input, shape index: {}]
  %s3 = inlined_call_operand.hbm [shape: bf16[512,128], index: 3, kind: output, shape index: {}]
  %s4 = sld [smem:[#allocation0]]
  $region22: #{conv2d.1} parent=0
    _
  %s6 = ssub.s32 1, %s4
  %s7 = scalar_select 0, %s6, %s4
  $region1: #{conv2d.1} parent=0
    #allocation2 [shape = 'u8[131072]{0}', space=vmem, size = 0x20000, scoped, tag = 'output window, operand 0, single buffered']
    #allocation3 [shape = 's32[1]{0}', space=sflag, size = 0x4, scoped, tag = 'scoped memory for conv2d.1']
    %8 = vsyncpa [#allocation3], 0
    // Predicated region
    $region2: #{conv2d.1} parent=1 // pred_check
      _
    $region3: #{conv2d.1} parent=1 // pred_check_branch
      %10 = sbr.rel (0) target = $region5
    $region4: #{conv2d.1} parent=1 // pred_region
      _
    $region5: #{conv2d.1} parent=1 // pred_fallthru
      _
    // Predicated region
    $region6: #{conv2d.1} parent=1 // pred_check
      _
    $region7: #{conv2d.1} parent=1 // pred_check_branch
      %12 = sbr.rel (0) target = $region9
    $region8: #{conv2d.1} parent=1 // pred_region
      _
    $region9: #{conv2d.1} parent=1 // pred_fallthru
      _
    // Predicated region
    $region10: #{conv2d.1} parent=1 // pred_check
      _
    $region11: #{conv2d.1} parent=1 // pred_check_branch
      %14 = sbr.rel (0) target = $region13
    $region12: #{conv2d.1} parent=1 // pred_region
      _
    $region13: #{conv2d.1} parent=1 // pred_fallthru
      _
    %v16 = vld [vmem:[%s0] sm:$0xff]
    %v17 = vld [vmem:[%s0 + $0x8] sm:$0xff]
    %v18 = vld [vmem:[%s0 + $0x10] sm:$0xff]
    %v19 = vld [vmem:[%s0 + $0x18] sm:$0xff]
    %v20 = vld [vmem:[%s0 + $0x20] sm:$0xff]
    %v21 = vld [vmem:[%s0 + $0x28] sm:$0xff]
    %v22 = vld [vmem:[%s0 + $0x30] sm:$0xff]
    %v23 = vld [vmem:[%s0 + $0x38] sm:$0xff]
    %v24 = vld [vmem:[%s0 + $0x40] sm:$0xff]
    %v25 = vld [vmem:[%s0 + $0x48] sm:$0xff]
    %v26 = vld [vmem:[%s0 + $0x50] sm:$0xff]
    %v27 = vld [vmem:[%s0 + $0x58] sm:$0xff]
    %v28 = vld [vmem:[%s0 + $0x60] sm:$0xff]
    %v29 = vld [vmem:[%s0 + $0x68] sm:$0xff]
    %v30 = vld [vmem:[%s0 + $0x70] sm:$0xff]
    %v31 = vld [vmem:[%s0 + $0x78] sm:$0xff]
    %v32 = vld [vmem:[%s0 + $0x80] sm:$0xff]
    %v33 = vld [vmem:[%s0 + $0x88] sm:$0xff]
    %v34 = vld [vmem:[%s0 + $0x90] sm:$0xff]
    %v35 = vld [vmem:[%s0 + $0x98] sm:$0xff]
    %v36 = vld [vmem:[%s0 + $0xa0] sm:$0xff]
    %v37 = vld [vmem:[%s0 + $0xa8] sm:$0xff]
    %v38 = vld [vmem:[%s0 + $0xb0] sm:$0xff]
    %v39 = vld [vmem:[%s0 + $0xb8] sm:$0xff]
    %v40 = vld [vmem:[%s0 + $0xc0] sm:$0xff]
    %v41 = vld [vmem:[%s0 + $0xc8] sm:$0xff]
    %v42 = vld [vmem:[%s0 + $0xd0] sm:$0xff]
    %v43 = vld [vmem:[%s0 + $0xd8] sm:$0xff]
    %v44 = vld [vmem:[%s0 + $0xe0] sm:$0xff]
    %v45 = vld [vmem:[%s0 + $0xe8] sm:$0xff]
    %v46 = vld [vmem:[%s0 + $0xf0] sm:$0xff]
    %v47 = vld [vmem:[%s0 + $0xf8] sm:$0xff]
    %v48 = vld [vmem:[%s0 + $0x100] sm:$0xff]
    %v49 = vld [vmem:[%s0 + $0x108] sm:$0xff]
    %v50 = vld [vmem:[%s0 + $0x110] sm:$0xff]
    %v51 = vld [vmem:[%s0 + $0x118] sm:$0xff]
    %v52 = vld [vmem:[%s0 + $0x120] sm:$0xff]
    %v53 = vld [vmem:[%s0 + $0x128] sm:$0xff]
    %v54 = vld [vmem:[%s0 + $0x130] sm:$0xff]
    %v55 = vld [vmem:[%s0 + $0x138] sm:$0xff]
    %v56 = vld [vmem:[%s0 + $0x140] sm:$0xff]
    %v57 = vld [vmem:[%s0 + $0x148] sm:$0xff]
    %v58 = vld [vmem:[%s0 + $0x150] sm:$0xff]
    %v59 = vld [vmem:[%s0 + $0x158] sm:$0xff]
    %v60 = vld [vmem:[%s0 + $0x160] sm:$0xff]
    %v61 = vld [vmem:[%s0 + $0x168] sm:$0xff]
    %v62 = vld [vmem:[%s0 + $0x170] sm:$0xff]
    %v63 = vld [vmem:[%s0 + $0x178] sm:$0xff]
    %v64 = vld [vmem:[%s0 + $0x180] sm:$0xff]
    %v65 = vld [vmem:[%s0 + $0x188] sm:$0xff]
    %v66 = vld [vmem:[%s0 + $0x190] sm:$0xff]
    %v67 = vld [vmem:[%s0 + $0x198] sm:$0xff]
    %v68 = vld [vmem:[%s0 + $0x1a0] sm:$0xff]
    %v69 = vld [vmem:[%s0 + $0x1a8] sm:$0xff]
    %v70 = vld [vmem:[%s0 + $0x1b0] sm:$0xff]
    %v71 = vld [vmem:[%s0 + $0x1b8] sm:$0xff]
    %v72 = vld [vmem:[%s0 + $0x1c0] sm:$0xff]
    %v73 = vld [vmem:[%s0 + $0x1c8] sm:$0xff]
    %v74 = vld [vmem:[%s0 + $0x1d0] sm:$0xff]
    %v75 = vld [vmem:[%s0 + $0x1d8] sm:$0xff]
    %v76 = vld [vmem:[%s0 + $0x1e0] sm:$0xff]
    %v77 = vld [vmem:[%s0 + $0x1e8] sm:$0xff]
    %v78 = vld [vmem:[%s0 + $0x1f0] sm:$0xff]
    %v79 = vld [vmem:[%s0 + $0x1f8] sm:$0xff]
    %v80 = vld [vmem:[%s1] sm:$0xf]
    %v81 = vld [vmem:[%s1 + $0x4] sm:$0xf]
    %v82 = vld [vmem:[%s1 + $0x8] sm:$0xf]
    %v83 = vld [vmem:[%s1 + $0xc] sm:$0xf]
    %v84 = vld [vmem:[%s1 + $0x10] sm:$0xf]
    %v85 = vld [vmem:[%s1 + $0x14] sm:$0xf]
    %v86 = vld [vmem:[%s1 + $0x18] sm:$0xf]
    %v87 = vld [vmem:[%s1 + $0x1c] sm:$0xf]
    %v88 = vld [vmem:[%s1 + $0x20] sm:$0xf]
    %v89 = vld [vmem:[%s1 + $0x24] sm:$0xf]
    %v90 = vld [vmem:[%s1 + $0x28] sm:$0xf]
    %v91 = vld [vmem:[%s1 + $0x2c] sm:$0xf]
    %v92 = vld [vmem:[%s1 + $0x30] sm:$0xf]
    %v93 = vld [vmem:[%s1 + $0x34] sm:$0xf]
    %v94 = vld [vmem:[%s1 + $0x38] sm:$0xf]
    %v95 = vld [vmem:[%s1 + $0x3c] sm:$0xf]
    %v96 = vld [vmem:[%s1 + $0x40] sm:$0xf]
    %v97 = vld [vmem:[%s1 + $0x44] sm:$0xf]
    %v98 = vld [vmem:[%s1 + $0x48] sm:$0xf]
    %v99 = vld [vmem:[%s1 + $0x4c] sm:$0xf]
    %v100 = vld [vmem:[%s1 + $0x50] sm:$0xf]
    %v101 = vld [vmem:[%s1 + $0x54] sm:$0xf]
    %v102 = vld [vmem:[%s1 + $0x58] sm:$0xf]
    %v103 = vld [vmem:[%s1 + $0x5c] sm:$0xf]
    %v104 = vld [vmem:[%s1 + $0x60] sm:$0x3]
    %v105 = vld [vmem:[%s2] sm:$0x1]
    %v107 = vlaneseq
    %v108 = vshrl.u32 %v107, 7
    %v109 = vsub.s32 0, %v108
    %v110 = vrot.slane %v105, %v109
    %v176 = vunpack.c.l.b16 %v16
    %v177 = vunpack.c.h.b16 %v16
    %v178 = vunpack.c.l.b16 %v17
    %v179 = vunpack.c.h.b16 %v17
    %v180 = vunpack.c.l.b16 %v18
    %v181 = vunpack.c.h.b16 %v18
    %v182 = vunpack.c.l.b16 %v19
    %v183 = vunpack.c.h.b16 %v19
    %v184 = vunpack.c.l.b16 %v20
    %v185 = vunpack.c.h.b16 %v20
    %v186 = vunpack.c.l.b16 %v21
    %v187 = vunpack.c.h.b16 %v21
    %v188 = vunpack.c.l.b16 %v22
    %v189 = vunpack.c.h.b16 %v22
    %v190 = vunpack.c.l.b16 %v23
    %v191 = vunpack.c.h.b16 %v23
    %v192 = vunpack.c.l.b16 %v24
    %v193 = vunpack.c.h.b16 %v24
    %v194 = vunpack.c.l.b16 %v25
    %v195 = vunpack.c.h.b16 %v25
    %v196 = vunpack.c.l.b16 %v26
    %v197 = vunpack.c.h.b16 %v26
    %v198 = vunpack.c.l.b16 %v27
    %v199 = vunpack.c.h.b16 %v27
    %v200 = vunpack.c.l.b16 %v28
    %v201 = vunpack.c.h.b16 %v28
    %v202 = vunpack.c.l.b16 %v29
    %v203 = vunpack.c.h.b16 %v29
    %v204 = vunpack.c.l.b16 %v30
    %v205 = vunpack.c.h.b16 %v30
    %v206 = vunpack.c.l.b16 %v31
    %v207 = vunpack.c.h.b16 %v31
    %v208 = vunpack.c.l.b16 %v32
    %v209 = vunpack.c.h.b16 %v32
    %v210 = vunpack.c.l.b16 %v33
    %v211 = vunpack.c.h.b16 %v33
    %v212 = vunpack.c.l.b16 %v34
    %v213 = vunpack.c.h.b16 %v34
    %v214 = vunpack.c.l.b16 %v35
    %v215 = vunpack.c.h.b16 %v35
    %v216 = vunpack.c.l.b16 %v36
    %v217 = vunpack.c.h.b16 %v36
    %v218 = vunpack.c.l.b16 %v37
    %v219 = vunpack.c.h.b16 %v37
    %v220 = vunpack.c.l.b16 %v38
    %v221 = vunpack.c.h.b16 %v38
    %v222 = vunpack.c.l.b16 %v39
    %v223 = vunpack.c.h.b16 %v39
    %v224 = vunpack.c.l.b16 %v40
    %v225 = vunpack.c.h.b16 %v40
    %v226 = vunpack.c.l.b16 %v41
    %v227 = vunpack.c.h.b16 %v41
    %v228 = vunpack.c.l.b16 %v42
    %v229 = vunpack.c.h.b16 %v42
    %v230 = vunpack.c.l.b16 %v43
    %v231 = vunpack.c.h.b16 %v43
    %v232 = vunpack.c.l.b16 %v44
    %v233 = vunpack.c.h.b16 %v44
    %v234 = vunpack.c.l.b16 %v45
    %v235 = vunpack.c.h.b16 %v45
    %v236 = vunpack.c.l.b16 %v46
    %v237 = vunpack.c.h.b16 %v46
    %v238 = vunpack.c.l.b16 %v47
    %v239 = vunpack.c.h.b16 %v47
    %v240 = vunpack.c.l.b16 %v48
    %v241 = vunpack.c.h.b16 %v48
    %v242 = vunpack.c.l.b16 %v49
    %v243 = vunpack.c.h.b16 %v49
    %v244 = vunpack.c.l.b16 %v50
    %v245 = vunpack.c.h.b16 %v50
    %v246 = vunpack.c.l.b16 %v51
    %v247 = vunpack.c.h.b16 %v51
    %v248 = vunpack.c.l.b16 %v52
    %v249 = vunpack.c.h.b16 %v52
    %v250 = vunpack.c.l.b16 %v53
    %v251 = vunpack.c.h.b16 %v53
    %v252 = vunpack.c.l.b16 %v54
    %v253 = vunpack.c.h.b16 %v54
    %v254 = vunpack.c.l.b16 %v55
    %v255 = vunpack.c.h.b16 %v55
    %v256 = vunpack.c.l.b16 %v56
    %v257 = vunpack.c.h.b16 %v56
    %v258 = vunpack.c.l.b16 %v57
    %v259 = vunpack.c.h.b16 %v57
    %v260 = vunpack.c.l.b16 %v58
    %v261 = vunpack.c.h.b16 %v58
    %v262 = vunpack.c.l.b16 %v59
    %v263 = vunpack.c.h.b16 %v59
    %v264 = vunpack.c.l.b16 %v60
    %v265 = vunpack.c.h.b16 %v60
    %v266 = vunpack.c.l.b16 %v61
    %v267 = vunpack.c.h.b16 %v61
    %v268 = vunpack.c.l.b16 %v62
    %v269 = vunpack.c.h.b16 %v62
    %v270 = vunpack.c.l.b16 %v63
    %v271 = vunpack.c.h.b16 %v63
    %v272 = vunpack.c.l.b16 %v64
    %v273 = vunpack.c.h.b16 %v64
    %v274 = vunpack.c.l.b16 %v65
    %v275 = vunpack.c.h.b16 %v65
    %v276 = vunpack.c.l.b16 %v66
    %v277 = vunpack.c.h.b16 %v66
    %v278 = vunpack.c.l.b16 %v67
    %v279 = vunpack.c.h.b16 %v67
    %v280 = vunpack.c.l.b16 %v68
    %v281 = vunpack.c.h.b16 %v68
    %v282 = vunpack.c.l.b16 %v69
    %v283 = vunpack.c.h.b16 %v69
    %v284 = vunpack.c.l.b16 %v70
    %v285 = vunpack.c.h.b16 %v70
    %v286 = vunpack.c.l.b16 %v71
    %v287 = vunpack.c.h.b16 %v71
    %v288 = vunpack.c.l.b16 %v72
    %v289 = vunpack.c.h.b16 %v72
    %v290 = vunpack.c.l.b16 %v73
    %v291 = vunpack.c.h.b16 %v73
    %v292 = vunpack.c.l.b16 %v74
    %v293 = vunpack.c.h.b16 %v74
    %v294 = vunpack.c.l.b16 %v75
    %v295 = vunpack.c.h.b16 %v75
    %v296 = vunpack.c.l.b16 %v76
    %v297 = vunpack.c.h.b16 %v76
    %v298 = vunpack.c.l.b16 %v77
    %v299 = vunpack.c.h.b16 %v77
    %v300 = vunpack.c.l.b16 %v78
    %v301 = vunpack.c.h.b16 %v78
    %v302 = vunpack.c.l.b16 %v79
    %v303 = vunpack.c.h.b16 %v79
    %v304 = vpack.c.b16 %v178, %v176
    %v305 = vpack.c.b16 %v179, %v177
    %v306 = vpack.c.b16 %v182, %v180
    %v307 = vpack.c.b16 %v183, %v181
    %v308 = vpack.c.b16 %v186, %v184
    %v309 = vpack.c.b16 %v187, %v185
    %v310 = vpack.c.b16 %v190, %v188
    %v311 = vpack.c.b16 %v191, %v189
    %v312 = vpack.c.b16 %v194, %v192
    %v313 = vpack.c.b16 %v195, %v193
    %v314 = vpack.c.b16 %v198, %v196
    %v315 = vpack.c.b16 %v199, %v197
    %v316 = vpack.c.b16 %v202, %v200
    %v317 = vpack.c.b16 %v203, %v201
    %v318 = vpack.c.b16 %v206, %v204
    %v319 = vpack.c.b16 %v207, %v205
    %v320 = vpack.c.b16 %v210, %v208
    %v321 = vpack.c.b16 %v211, %v209
    %v322 = vpack.c.b16 %v214, %v212
    %v323 = vpack.c.b16 %v215, %v213
    %v324 = vpack.c.b16 %v218, %v216
    %v325 = vpack.c.b16 %v219, %v217
    %v326 = vpack.c.b16 %v222, %v220
    %v327 = vpack.c.b16 %v223, %v221
    %v328 = vpack.c.b16 %v226, %v224
    %v329 = vpack.c.b16 %v227, %v225
    %v330 = vpack.c.b16 %v230, %v228
    %v331 = vpack.c.b16 %v231, %v229
    %v332 = vpack.c.b16 %v234, %v232
    %v333 = vpack.c.b16 %v235, %v233
    %v334 = vpack.c.b16 %v238, %v236
    %v335 = vpack.c.b16 %v239, %v237
    %v336 = vpack.c.b16 %v242, %v240
    %v337 = vpack.c.b16 %v243, %v241
    %v338 = vpack.c.b16 %v246, %v244
    %v339 = vpack.c.b16 %v247, %v245
    %v340 = vpack.c.b16 %v250, %v248
    %v341 = vpack.c.b16 %v251, %v249
    %v342 = vpack.c.b16 %v254, %v252
    %v343 = vpack.c.b16 %v255, %v253
    %v344 = vpack.c.b16 %v258, %v256
    %v345 = vpack.c.b16 %v259, %v257
    %v346 = vpack.c.b16 %v262, %v260
    %v347 = vpack.c.b16 %v263, %v261
    %v348 = vpack.c.b16 %v266, %v264
    %v349 = vpack.c.b16 %v267, %v265
    %v350 = vpack.c.b16 %v270, %v268
    %v351 = vpack.c.b16 %v271, %v269
    %v352 = vpack.c.b16 %v274, %v272
    %v353 = vpack.c.b16 %v275, %v273
    %v354 = vpack.c.b16 %v278, %v276
    %v355 = vpack.c.b16 %v279, %v277
    %v356 = vpack.c.b16 %v282, %v280
    %v357 = vpack.c.b16 %v283, %v281
    %v358 = vpack.c.b16 %v286, %v284
    %v359 = vpack.c.b16 %v287, %v285
    %v360 = vpack.c.b16 %v290, %v288
    %v361 = vpack.c.b16 %v291, %v289
    %v362 = vpack.c.b16 %v294, %v292
    %v363 = vpack.c.b16 %v295, %v293
    %v364 = vpack.c.b16 %v298, %v296
    %v365 = vpack.c.b16 %v299, %v297
    %v366 = vpack.c.b16 %v302, %v300
    %v367 = vpack.c.b16 %v303, %v301
    %v425 = vunpack.c.l.b16 %v80
    %v426 = vunpack.c.l.b16 %v81
    %v427 = vunpack.c.l.b16 %v82
    %v428 = vunpack.c.l.b16 %v83
    %v429 = vunpack.c.l.b16 %v84
    %v430 = vunpack.c.l.b16 %v85
    %v431 = vunpack.c.l.b16 %v86
    %v432 = vunpack.c.l.b16 %v87
    %v433 = vunpack.c.l.b16 %v88
    %v434 = vunpack.c.l.b16 %v89
    %v435 = vunpack.c.l.b16 %v90
    %v436 = vunpack.c.l.b16 %v91
    %v437 = vunpack.c.l.b16 %v92
    %v438 = vunpack.c.l.b16 %v93
    %v439 = vunpack.c.l.b16 %v94
    %v440 = vunpack.c.l.b16 %v95
    %v441 = vunpack.c.l.b16 %v96
    %v442 = vunpack.c.l.b16 %v97
    %v443 = vunpack.c.l.b16 %v98
    %v444 = vunpack.c.l.b16 %v99
    %v445 = vunpack.c.l.b16 %v100
    %v446 = vunpack.c.l.b16 %v101
    %v447 = vunpack.c.l.b16 %v102
    %v448 = vunpack.c.l.b16 %v103
    %v449 = vunpack.c.l.b16 %v104
    %v450 = vpack.c.b16 %v426, %v425
    %v451 = vpack.c.b16 %v428, %v427
    %v452 = vpack.c.b16 %v430, %v429
    %v453 = vpack.c.b16 %v432, %v431
    %v454 = vpack.c.b16 %v434, %v433
    %v455 = vpack.c.b16 %v436, %v435
    %v456 = vpack.c.b16 %v438, %v437
    %v457 = vpack.c.b16 %v440, %v439
    %v458 = vpack.c.b16 %v442, %v441
    %v459 = vpack.c.b16 %v444, %v443
    %v460 = vpack.c.b16 %v446, %v445
    %v461 = vpack.c.b16 %v448, %v447
    %v462 = vpack.c.b16 %v449, %v449
    %vm475 = vcmask 556032
    %v477 = vsel %vm475, %v305, 0
    %v480 = vsel %vm475, %v307, 0
    %v483 = vsel %vm475, %v309, 0
    %v486 = vsel %vm475, %v311, 0
    %v489 = vsel %vm475, %v313, 0
    %v492 = vsel %vm475, %v315, 0
    %v495 = vsel %vm475, %v317, 0
    %v498 = vsel %vm475, %v319, 0
    %v501 = vsel %vm475, %v321, 0
    %v504 = vsel %vm475, %v323, 0
    %v507 = vsel %vm475, %v325, 0
    %v510 = vsel %vm475, %v327, 0
    %v513 = vsel %vm475, %v329, 0
    %v516 = vsel %vm475, %v331, 0
    %v519 = vsel %vm475, %v333, 0
    %v522 = vsel %vm475, %v335, 0
    %v525 = vsel %vm475, %v337, 0
    %v528 = vsel %vm475, %v339, 0
    %v531 = vsel %vm475, %v341, 0
    %v534 = vsel %vm475, %v343, 0
    %v537 = vsel %vm475, %v345, 0
    %v540 = vsel %vm475, %v347, 0
    %v543 = vsel %vm475, %v349, 0
    %v546 = vsel %vm475, %v351, 0
    %v549 = vsel %vm475, %v353, 0
    %v552 = vsel %vm475, %v355, 0
    %v555 = vsel %vm475, %v357, 0
    %v558 = vsel %vm475, %v359, 0
    %v561 = vsel %vm475, %v361, 0
    %v564 = vsel %vm475, %v363, 0
    %v567 = vsel %vm475, %v365, 0
    %v570 = vsel %vm475, %v367, 0
    %vm572 = vcmask 1041408
    %v574 = vsel %vm572, %v462, 0
    %576 = vmatprep.subr.bf16.mxu0 0
    %577 = vmatpush1.bf16.msra.mxu0 %v457
    %578 = vmatprep.subr.bf16.mxu0 0
    %579 = vmatpush1.bf16.msra.mxu0 %v456
    %580 = vmatprep.subr.bf16.mxu0 0
    %581 = vmatpush1.bf16.msra.mxu0 %v455
    %582 = vmatprep.subr.bf16.mxu0 0
    %583 = vmatpush1.bf16.msra.mxu0 %v454
    %584 = vmatprep.subr.bf16.mxu0 0
    %585 = vmatpush1.bf16.msra.mxu0 %v453
    %586 = vmatprep.subr.bf16.mxu0 0
    %587 = vmatpush1.bf16.msra.mxu0 %v452
    %588 = vmatprep.subr.bf16.mxu0 0
    %589 = vmatpush1.bf16.msra.mxu0 %v451
    %590 = vmatprep.subr.bf16.mxu0 0
    %591 = vmatpush1.bf16.msra.mxu0 %v450
    %592 = vmatprep.subr.bf16.mxu0 0
    %593 = vmatpush2.bf16.msra.mxu0 0
    %594 = vmatprep.subr.bf16.mxu0 0
    %595 = vmatpush2.bf16.msra.mxu0 0
    %596 = vmatprep.subr.bf16.mxu0 0
    %597 = vmatpush2.bf16.msra.mxu0 0
    %598 = vmatprep.subr.bf16.mxu0 0
    %599 = vmatpush2.bf16.msra.mxu0 %v574
    %600 = vmatprep.subr.bf16.mxu0 0
    %601 = vmatpush2.bf16.msra.mxu0 %v461
    %602 = vmatprep.subr.bf16.mxu0 0
    %603 = vmatpush2.bf16.msra.mxu0 %v460
    %604 = vmatprep.subr.bf16.mxu0 0
    %605 = vmatpush2.bf16.msra.mxu0 %v459
    %606 = vmatprep.subr.bf16.mxu0 0
    %607 = vmatpush2.bf16.msra.mxu0 %v458
    %608 = vmatprep.mubr.bf16.mxu0 %v477
    %609 = vmatmul.mubr.bf16.gmra.mxu0 %v304
    %v610 = vpop.f32.mrf.mxu0
    %v611 = vadd.f32 %v110, %v610
    %v612 = vpop.f32.mrf.mxu0
    %v613 = vpop.f32.mrf.mxu0
    %v614 = vadd.f32 %v110, %v613
    %v615 = vpop.f32.mrf.mxu0
    %616 = vmatprep.mubr.bf16.mxu0 %v480
    %617 = vmatmul.mubr.bf16.gmra.mxu0 %v306
    %v618 = vpop.f32.mrf.mxu0
    %v619 = vadd.f32 %v110, %v618
    %v620 = vpop.f32.mrf.mxu0
    %v621 = vpop.f32.mrf.mxu0
    %v622 = vadd.f32 %v110, %v621
    %v623 = vpop.f32.mrf.mxu0
    %624 = vmatprep.mubr.bf16.mxu0 %v483
    %625 = vmatmul.mubr.bf16.gmra.mxu0 %v308
    %v626 = vpop.f32.mrf.mxu0
    %v627 = vadd.f32 %v110, %v626
    %v628 = vpop.f32.mrf.mxu0
    %v629 = vpop.f32.mrf.mxu0
    %v630 = vadd.f32 %v110, %v629
    %v631 = vpop.f32.mrf.mxu0
    %632 = vmatprep.mubr.bf16.mxu0 %v486
    %633 = vmatmul.mubr.bf16.gmra.mxu0 %v310
    %v634 = vpop.f32.mrf.mxu0
    %v635 = vadd.f32 %v110, %v634
    %v636 = vpop.f32.mrf.mxu0
    %v637 = vpop.f32.mrf.mxu0
    %v638 = vadd.f32 %v110, %v637
    %v639 = vpop.f32.mrf.mxu0
    %640 = vmatprep.mubr.bf16.mxu0 %v489
    %641 = vmatmul.mubr.bf16.gmra.mxu0 %v312
    %v642 = vpop.f32.mrf.mxu0
    %v643 = vadd.f32 %v110, %v642
    %v644 = vpop.f32.mrf.mxu0
    %v645 = vpop.f32.mrf.mxu0
    %v646 = vadd.f32 %v110, %v645
    %v647 = vpop.f32.mrf.mxu0
    %648 = vmatprep.mubr.bf16.mxu0 %v492
    %649 = vmatmul.mubr.bf16.gmra.mxu0 %v314
    %v650 = vpop.f32.mrf.mxu0
    %v651 = vadd.f32 %v110, %v650
    %v652 = vpop.f32.mrf.mxu0
    %v653 = vpop.f32.mrf.mxu0
    %v654 = vadd.f32 %v110, %v653
    %v655 = vpop.f32.mrf.mxu0
    %656 = vmatprep.mubr.bf16.mxu0 %v495
    %657 = vmatmul.mubr.bf16.gmra.mxu0 %v316
    %v658 = vpop.f32.mrf.mxu0
    %v659 = vadd.f32 %v110, %v658
    %v660 = vpop.f32.mrf.mxu0
    %v661 = vpop.f32.mrf.mxu0
    %v662 = vadd.f32 %v110, %v661
    %v663 = vpop.f32.mrf.mxu0
    %664 = vmatprep.mubr.bf16.mxu0 %v498
    %665 = vmatmul.mubr.bf16.gmra.mxu0 %v318
    %v666 = vpop.f32.mrf.mxu0
    %v667 = vadd.f32 %v110, %v666
    %v668 = vpop.f32.mrf.mxu0
    %v669 = vpop.f32.mrf.mxu0
    %v670 = vadd.f32 %v110, %v669
    %v671 = vpop.f32.mrf.mxu0
    %672 = vmatprep.mubr.bf16.mxu0 %v501
    %673 = vmatmul.mubr.bf16.gmra.mxu0 %v320
    %v674 = vpop.f32.mrf.mxu0
    %v675 = vadd.f32 %v110, %v674
    %v676 = vpop.f32.mrf.mxu0
    %v677 = vpop.f32.mrf.mxu0
    %v678 = vadd.f32 %v110, %v677
    %v679 = vpop.f32.mrf.mxu0
    %680 = vmatprep.mubr.bf16.mxu0 %v504
    %681 = vmatmul.mubr.bf16.gmra.mxu0 %v322
    %v682 = vpop.f32.mrf.mxu0
    %v683 = vadd.f32 %v110, %v682
    %v684 = vpop.f32.mrf.mxu0
    %v685 = vpop.f32.mrf.mxu0
    %v686 = vadd.f32 %v110, %v685
    %v687 = vpop.f32.mrf.mxu0
    %688 = vmatprep.mubr.bf16.mxu0 %v507
    %689 = vmatmul.mubr.bf16.gmra.mxu0 %v324
    %v690 = vpop.f32.mrf.mxu0
    %v691 = vadd.f32 %v110, %v690
    %v692 = vpop.f32.mrf.mxu0
    %v693 = vpop.f32.mrf.mxu0
    %v694 = vadd.f32 %v110, %v693
    %v695 = vpop.f32.mrf.mxu0
    %696 = vmatprep.mubr.bf16.mxu0 %v510
    %697 = vmatmul.mubr.bf16.gmra.mxu0 %v326
    %v698 = vpop.f32.mrf.mxu0
    %v699 = vadd.f32 %v110, %v698
    %v700 = vpop.f32.mrf.mxu0
    %v701 = vpop.f32.mrf.mxu0
    %v702 = vadd.f32 %v110, %v701
    %v703 = vpop.f32.mrf.mxu0
    %704 = vmatprep.mubr.bf16.mxu0 %v513
    %705 = vmatmul.mubr.bf16.gmra.mxu0 %v328
    %v706 = vpop.f32.mrf.mxu0
    %v707 = vadd.f32 %v110, %v706
    %v708 = vpop.f32.mrf.mxu0
    %v709 = vpop.f32.mrf.mxu0
    %v710 = vadd.f32 %v110, %v709
    %v711 = vpop.f32.mrf.mxu0
    %712 = vmatprep.mubr.bf16.mxu0 %v516
    %713 = vmatmul.mubr.bf16.gmra.mxu0 %v330
    %v714 = vpop.f32.mrf.mxu0
    %v715 = vadd.f32 %v110, %v714
    %v716 = vpop.f32.mrf.mxu0
    %v717 = vpop.f32.mrf.mxu0
    %v718 = vadd.f32 %v110, %v717
    %v719 = vpop.f32.mrf.mxu0
    %720 = vmatprep.mubr.bf16.mxu0 %v519
    %721 = vmatmul.mubr.bf16.gmra.mxu0 %v332
    %v722 = vpop.f32.mrf.mxu0
    %v723 = vadd.f32 %v110, %v722
    %v724 = vpop.f32.mrf.mxu0
    %v725 = vpop.f32.mrf.mxu0
    %v726 = vadd.f32 %v110, %v725
    %v727 = vpop.f32.mrf.mxu0
    %728 = vmatprep.mubr.bf16.mxu0 %v522
    %729 = vmatmul.mubr.bf16.gmra.mxu0 %v334
    %v730 = vpop.f32.mrf.mxu0
    %v731 = vadd.f32 %v110, %v730
    %v732 = vpop.f32.mrf.mxu0
    %v733 = vpop.f32.mrf.mxu0
    %v734 = vadd.f32 %v110, %v733
    %v735 = vpop.f32.mrf.mxu0
    %736 = vmatprep.mubr.bf16.mxu0 %v525
    %737 = vmatmul.mubr.bf16.gmra.mxu0 %v336
    %v738 = vpop.f32.mrf.mxu0
    %v739 = vadd.f32 %v110, %v738
    %v740 = vpop.f32.mrf.mxu0
    %v741 = vpop.f32.mrf.mxu0
    %v742 = vadd.f32 %v110, %v741
    %v743 = vpop.f32.mrf.mxu0
    %744 = vmatprep.mubr.bf16.mxu0 %v528
    %745 = vmatmul.mubr.bf16.gmra.mxu0 %v338
    %v746 = vpop.f32.mrf.mxu0
    %v747 = vadd.f32 %v110, %v746
    %v748 = vpop.f32.mrf.mxu0
    %v749 = vpop.f32.mrf.mxu0
    %v750 = vadd.f32 %v110, %v749
    %v751 = vpop.f32.mrf.mxu0
    %752 = vmatprep.mubr.bf16.mxu0 %v531
    %753 = vmatmul.mubr.bf16.gmra.mxu0 %v340
    %v754 = vpop.f32.mrf.mxu0
    %v755 = vadd.f32 %v110, %v754
    %v756 = vpop.f32.mrf.mxu0
    %v757 = vpop.f32.mrf.mxu0
    %v758 = vadd.f32 %v110, %v757
    %v759 = vpop.f32.mrf.mxu0
    %760 = vmatprep.mubr.bf16.mxu0 %v534
    %761 = vmatmul.mubr.bf16.gmra.mxu0 %v342
    %v762 = vpop.f32.mrf.mxu0
    %v763 = vadd.f32 %v110, %v762
    %v764 = vpop.f32.mrf.mxu0
    %v765 = vpop.f32.mrf.mxu0
    %v766 = vadd.f32 %v110, %v765
    %v767 = vpop.f32.mrf.mxu0
    %768 = vmatprep.mubr.bf16.mxu0 %v537
    %769 = vmatmul.mubr.bf16.gmra.mxu0 %v344
    %v770 = vpop.f32.mrf.mxu0
    %v771 = vadd.f32 %v110, %v770
    %v772 = vpop.f32.mrf.mxu0
    %v773 = vpop.f32.mrf.mxu0
    %v774 = vadd.f32 %v110, %v773
    %v775 = vpop.f32.mrf.mxu0
    %776 = vmatprep.mubr.bf16.mxu0 %v540
    %777 = vmatmul.mubr.bf16.gmra.mxu0 %v346
    %v778 = vpop.f32.mrf.mxu0
    %v779 = vadd.f32 %v110, %v778
    %v780 = vpop.f32.mrf.mxu0
    %v781 = vpop.f32.mrf.mxu0
    %v782 = vadd.f32 %v110, %v781
    %v783 = vpop.f32.mrf.mxu0
    %784 = vmatprep.mubr.bf16.mxu0 %v543
    %785 = vmatmul.mubr.bf16.gmra.mxu0 %v348
    %v786 = vpop.f32.mrf.mxu0
    %v787 = vadd.f32 %v110, %v786
    %v788 = vpop.f32.mrf.mxu0
    %v789 = vpop.f32.mrf.mxu0
    %v790 = vadd.f32 %v110, %v789
    %v791 = vpop.f32.mrf.mxu0
    %792 = vmatprep.mubr.bf16.mxu0 %v546
    %793 = vmatmul.mubr.bf16.gmra.mxu0 %v350
    %v794 = vpop.f32.mrf.mxu0
    %v795 = vadd.f32 %v110, %v794
    %v796 = vpop.f32.mrf.mxu0
    %v797 = vpop.f32.mrf.mxu0
    %v798 = vadd.f32 %v110, %v797
    %v799 = vpop.f32.mrf.mxu0
    %800 = vmatprep.mubr.bf16.mxu0 %v549
    %801 = vmatmul.mubr.bf16.gmra.mxu0 %v352
    %v802 = vpop.f32.mrf.mxu0
    %v803 = vadd.f32 %v110, %v802
    %v804 = vpop.f32.mrf.mxu0
    %v805 = vpop.f32.mrf.mxu0
    %v806 = vadd.f32 %v110, %v805
    %v807 = vpop.f32.mrf.mxu0
    %808 = vmatprep.mubr.bf16.mxu0 %v552
    %809 = vmatmul.mubr.bf16.gmra.mxu0 %v354
    %v810 = vpop.f32.mrf.mxu0
    %v811 = vadd.f32 %v110, %v810
    %v812 = vpop.f32.mrf.mxu0
    %v813 = vpop.f32.mrf.mxu0
    %v814 = vadd.f32 %v110, %v813
    %v815 = vpop.f32.mrf.mxu0
    %816 = vmatprep.mubr.bf16.mxu0 %v555
    %817 = vmatmul.mubr.bf16.gmra.mxu0 %v356
    %v818 = vpop.f32.mrf.mxu0
    %v819 = vadd.f32 %v110, %v818
    %v820 = vpop.f32.mrf.mxu0
    %v821 = vpop.f32.mrf.mxu0
    %v822 = vadd.f32 %v110, %v821
    %v823 = vpop.f32.mrf.mxu0
    %824 = vmatprep.mubr.bf16.mxu0 %v558
    %825 = vmatmul.mubr.bf16.gmra.mxu0 %v358
    %v826 = vpop.f32.mrf.mxu0
    %v827 = vadd.f32 %v110, %v826
    %v828 = vpop.f32.mrf.mxu0
    %v829 = vpop.f32.mrf.mxu0
    %v830 = vadd.f32 %v110, %v829
    %v831 = vpop.f32.mrf.mxu0
    %832 = vmatprep.mubr.bf16.mxu0 %v561
    %833 = vmatmul.mubr.bf16.gmra.mxu0 %v360
    %v834 = vpop.f32.mrf.mxu0
    %v835 = vadd.f32 %v110, %v834
    %v836 = vpop.f32.mrf.mxu0
    %v837 = vpop.f32.mrf.mxu0
    %v838 = vadd.f32 %v110, %v837
    %v839 = vpop.f32.mrf.mxu0
    %840 = vmatprep.mubr.bf16.mxu0 %v564
    %841 = vmatmul.mubr.bf16.gmra.mxu0 %v362
    %v842 = vpop.f32.mrf.mxu0
    %v843 = vadd.f32 %v110, %v842
    %v844 = vpop.f32.mrf.mxu0
    %v845 = vpop.f32.mrf.mxu0
    %v846 = vadd.f32 %v110, %v845
    %v847 = vpop.f32.mrf.mxu0
    %848 = vmatprep.mubr.bf16.mxu0 %v567
    %849 = vmatmul.mubr.bf16.gmra.mxu0 %v364
    %v850 = vpop.f32.mrf.mxu0
    %v851 = vadd.f32 %v110, %v850
    %v852 = vpop.f32.mrf.mxu0
    %v853 = vpop.f32.mrf.mxu0
    %v854 = vadd.f32 %v110, %v853
    %v855 = vpop.f32.mrf.mxu0
    %856 = vmatprep.mubr.bf16.mxu0 %v570
    %857 = vmatmul.mubr.bf16.gmra.mxu0 %v366
    %v858 = vpop.f32.mrf.mxu0
    %v859 = vadd.f32 %v110, %v858
    %v860 = vpop.f32.mrf.mxu0
    %v861 = vpop.f32.mrf.mxu0
    %v862 = vadd.f32 %v110, %v861
    %v863 = vpop.f32.mrf.mxu0
    %864 = vdwg.mxu0
    %v865 = vmax.f32 %v611, 0.0
    %v866 = vmax.f32 %v614, 0.0
    %v867 = vmax.f32 %v619, 0.0
    %v868 = vmax.f32 %v622, 0.0
    %v869 = vmax.f32 %v627, 0.0
    %v870 = vmax.f32 %v630, 0.0
    %v871 = vmax.f32 %v635, 0.0
    %v872 = vmax.f32 %v638, 0.0
    %v873 = vmax.f32 %v643, 0.0
    %v874 = vmax.f32 %v646, 0.0
    %v875 = vmax.f32 %v651, 0.0
    %v876 = vmax.f32 %v654, 0.0
    %v877 = vmax.f32 %v659, 0.0
    %v878 = vmax.f32 %v662, 0.0
    %v879 = vmax.f32 %v667, 0.0
    %v880 = vmax.f32 %v670, 0.0
    %v881 = vmax.f32 %v675, 0.0
    %v882 = vmax.f32 %v678, 0.0
    %v883 = vmax.f32 %v683, 0.0
    %v884 = vmax.f32 %v686, 0.0
    %v885 = vmax.f32 %v691, 0.0
    %v886 = vmax.f32 %v694, 0.0
    %v887 = vmax.f32 %v699, 0.0
    %v888 = vmax.f32 %v702, 0.0
    %v889 = vmax.f32 %v707, 0.0
    %v890 = vmax.f32 %v710, 0.0
    %v891 = vmax.f32 %v715, 0.0
    %v892 = vmax.f32 %v718, 0.0
    %v893 = vmax.f32 %v723, 0.0
    %v894 = vmax.f32 %v726, 0.0
    %v895 = vmax.f32 %v731, 0.0
    %v896 = vmax.f32 %v734, 0.0
    %v897 = vmax.f32 %v739, 0.0
    %v898 = vmax.f32 %v742, 0.0
    %v899 = vmax.f32 %v747, 0.0
    %v900 = vmax.f32 %v750, 0.0
    %v901 = vmax.f32 %v755, 0.0
    %v902 = vmax.f32 %v758, 0.0
    %v903 = vmax.f32 %v763, 0.0
    %v904 = vmax.f32 %v766, 0.0
    %v905 = vmax.f32 %v771, 0.0
    %v906 = vmax.f32 %v774, 0.0
    %v907 = vmax.f32 %v779, 0.0
    %v908 = vmax.f32 %v782, 0.0
    %v909 = vmax.f32 %v787, 0.0
    %v910 = vmax.f32 %v790, 0.0
    %v911 = vmax.f32 %v795, 0.0
    %v912 = vmax.f32 %v798, 0.0
    %v913 = vmax.f32 %v803, 0.0
    %v914 = vmax.f32 %v806, 0.0
    %v915 = vmax.f32 %v811, 0.0
    %v916 = vmax.f32 %v814, 0.0
    %v917 = vmax.f32 %v819, 0.0
    %v918 = vmax.f32 %v822, 0.0
    %v919 = vmax.f32 %v827, 0.0
    %v920 = vmax.f32 %v830, 0.0
    %v921 = vmax.f32 %v835, 0.0
    %v922 = vmax.f32 %v838, 0.0
    %v923 = vmax.f32 %v843, 0.0
    %v924 = vmax.f32 %v846, 0.0
    %v925 = vmax.f32 %v851, 0.0
    %v926 = vmax.f32 %v854, 0.0
    %v927 = vmax.f32 %v859, 0.0
    %v928 = vmax.f32 %v862, 0.0
    %v929 = vpack.c.bf16 %v866, %v865
    %v930 = vpack.c.bf16 %v868, %v867
    %v931 = vpack.c.bf16 %v870, %v869
    %v932 = vpack.c.bf16 %v872, %v871
    %v933 = vpack.c.bf16 %v874, %v873
    %v934 = vpack.c.bf16 %v876, %v875
    %v935 = vpack.c.bf16 %v878, %v877
    %v936 = vpack.c.bf16 %v880, %v879
    %v937 = vpack.c.bf16 %v882, %v881
    %v938 = vpack.c.bf16 %v884, %v883
    %v939 = vpack.c.bf16 %v886, %v885
    %v940 = vpack.c.bf16 %v888, %v887
    %v941 = vpack.c.bf16 %v890, %v889
    %v942 = vpack.c.bf16 %v892, %v891
    %v943 = vpack.c.bf16 %v894, %v893
    %v944 = vpack.c.bf16 %v896, %v895
    %v945 = vpack.c.bf16 %v898, %v897
    %v946 = vpack.c.bf16 %v900, %v899
    %v947 = vpack.c.bf16 %v902, %v901
    %v948 = vpack.c.bf16 %v904, %v903
    %v949 = vpack.c.bf16 %v906, %v905
    %v950 = vpack.c.bf16 %v908, %v907
    %v951 = vpack.c.bf16 %v910, %v909
    %v952 = vpack.c.bf16 %v912, %v911
    %v953 = vpack.c.bf16 %v914, %v913
    %v954 = vpack.c.bf16 %v916, %v915
    %v955 = vpack.c.bf16 %v918, %v917
    %v956 = vpack.c.bf16 %v920, %v919
    %v957 = vpack.c.bf16 %v922, %v921
    %v958 = vpack.c.bf16 %v924, %v923
    %v959 = vpack.c.bf16 %v926, %v925
    %v960 = vpack.c.bf16 %v928, %v927
    %v993 = vunpack.c.l.b16 %v929
    %v994 = vunpack.c.h.b16 %v929
    %v995 = vunpack.c.l.b16 %v930
    %v996 = vunpack.c.h.b16 %v930
    %v997 = vunpack.c.l.b16 %v931
    %v998 = vunpack.c.h.b16 %v931
    %v999 = vunpack.c.l.b16 %v932
    %v1000 = vunpack.c.h.b16 %v932
    %v1001 = vunpack.c.l.b16 %v933
    %v1002 = vunpack.c.h.b16 %v933
    %v1003 = vunpack.c.l.b16 %v934
    %v1004 = vunpack.c.h.b16 %v934
    %v1005 = vunpack.c.l.b16 %v935
    %v1006 = vunpack.c.h.b16 %v935
    %v1007 = vunpack.c.l.b16 %v936
    %v1008 = vunpack.c.h.b16 %v936
    %v1009 = vunpack.c.l.b16 %v937
    %v1010 = vunpack.c.h.b16 %v937
    %v1011 = vunpack.c.l.b16 %v938
    %v1012 = vunpack.c.h.b16 %v938
    %v1013 = vunpack.c.l.b16 %v939
    %v1014 = vunpack.c.h.b16 %v939
    %v1015 = vunpack.c.l.b16 %v940
    %v1016 = vunpack.c.h.b16 %v940
    %v1017 = vunpack.c.l.b16 %v941
    %v1018 = vunpack.c.h.b16 %v941
    %v1019 = vunpack.c.l.b16 %v942
    %v1020 = vunpack.c.h.b16 %v942
    %v1021 = vunpack.c.l.b16 %v943
    %v1022 = vunpack.c.h.b16 %v943
    %v1023 = vunpack.c.l.b16 %v944
    %v1024 = vunpack.c.h.b16 %v944
    %v1025 = vunpack.c.l.b16 %v945
    %v1026 = vunpack.c.h.b16 %v945
    %v1027 = vunpack.c.l.b16 %v946
    %v1028 = vunpack.c.h.b16 %v946
    %v1029 = vunpack.c.l.b16 %v947
    %v1030 = vunpack.c.h.b16 %v947
    %v1031 = vunpack.c.l.b16 %v948
    %v1032 = vunpack.c.h.b16 %v948
    %v1033 = vunpack.c.l.b16 %v949
    %v1034 = vunpack.c.h.b16 %v949
    %v1035 = vunpack.c.l.b16 %v950
    %v1036 = vunpack.c.h.b16 %v950
    %v1037 = vunpack.c.l.b16 %v951
    %v1038 = vunpack.c.h.b16 %v951
    %v1039 = vunpack.c.l.b16 %v952
    %v1040 = vunpack.c.h.b16 %v952
    %v1041 = vunpack.c.l.b16 %v953
    %v1042 = vunpack.c.h.b16 %v953
    %v1043 = vunpack.c.l.b16 %v954
    %v1044 = vunpack.c.h.b16 %v954
    %v1045 = vunpack.c.l.b16 %v955
    %v1046 = vunpack.c.h.b16 %v955
    %v1047 = vunpack.c.l.b16 %v956
    %v1048 = vunpack.c.h.b16 %v956
    %v1049 = vunpack.c.l.b16 %v957
    %v1050 = vunpack.c.h.b16 %v957
    %v1051 = vunpack.c.l.b16 %v958
    %v1052 = vunpack.c.h.b16 %v958
    %v1053 = vunpack.c.l.b16 %v959
    %v1054 = vunpack.c.h.b16 %v959
    %v1055 = vunpack.c.l.b16 %v960
    %v1056 = vunpack.c.h.b16 %v960
    %v1057 = vpack.c.b16 %v993, %v993
    %v1058 = vpack.c.b16 %v994, %v994
    %v1059 = vpack.c.b16 %v995, %v995
    %v1060 = vpack.c.b16 %v996, %v996
    %v1061 = vpack.c.b16 %v997, %v997
    %v1062 = vpack.c.b16 %v998, %v998
    %v1063 = vpack.c.b16 %v999, %v999
    %v1064 = vpack.c.b16 %v1000, %v1000
    %v1065 = vpack.c.b16 %v1001, %v1001
    %v1066 = vpack.c.b16 %v1002, %v1002
    %v1067 = vpack.c.b16 %v1003, %v1003
    %v1068 = vpack.c.b16 %v1004, %v1004
    %v1069 = vpack.c.b16 %v1005, %v1005
    %v1070 = vpack.c.b16 %v1006, %v1006
    %v1071 = vpack.c.b16 %v1007, %v1007
    %v1072 = vpack.c.b16 %v1008, %v1008
    %v1073 = vpack.c.b16 %v1009, %v1009
    %v1074 = vpack.c.b16 %v1010, %v1010
    %v1075 = vpack.c.b16 %v1011, %v1011
    %v1076 = vpack.c.b16 %v1012, %v1012
    %v1077 = vpack.c.b16 %v1013, %v1013
    %v1078 = vpack.c.b16 %v1014, %v1014
    %v1079 = vpack.c.b16 %v1015, %v1015
    %v1080 = vpack.c.b16 %v1016, %v1016
    %v1081 = vpack.c.b16 %v1017, %v1017
    %v1082 = vpack.c.b16 %v1018, %v1018
    %v1083 = vpack.c.b16 %v1019, %v1019
    %v1084 = vpack.c.b16 %v1020, %v1020
    %v1085 = vpack.c.b16 %v1021, %v1021
    %v1086 = vpack.c.b16 %v1022, %v1022
    %v1087 = vpack.c.b16 %v1023, %v1023
    %v1088 = vpack.c.b16 %v1024, %v1024
    %v1089 = vpack.c.b16 %v1025, %v1025
    %v1090 = vpack.c.b16 %v1026, %v1026
    %v1091 = vpack.c.b16 %v1027, %v1027
    %v1092 = vpack.c.b16 %v1028, %v1028
    %v1093 = vpack.c.b16 %v1029, %v1029
    %v1094 = vpack.c.b16 %v1030, %v1030
    %v1095 = vpack.c.b16 %v1031, %v1031
    %v1096 = vpack.c.b16 %v1032, %v1032
    %v1097 = vpack.c.b16 %v1033, %v1033
    %v1098 = vpack.c.b16 %v1034, %v1034
    %v1099 = vpack.c.b16 %v1035, %v1035
    %v1100 = vpack.c.b16 %v1036, %v1036
    %v1101 = vpack.c.b16 %v1037, %v1037
    %v1102 = vpack.c.b16 %v1038, %v1038
    %v1103 = vpack.c.b16 %v1039, %v1039
    %v1104 = vpack.c.b16 %v1040, %v1040
    %v1105 = vpack.c.b16 %v1041, %v1041
    %v1106 = vpack.c.b16 %v1042, %v1042
    %v1107 = vpack.c.b16 %v1043, %v1043
    %v1108 = vpack.c.b16 %v1044, %v1044
    %v1109 = vpack.c.b16 %v1045, %v1045
    %v1110 = vpack.c.b16 %v1046, %v1046
    %v1111 = vpack.c.b16 %v1047, %v1047
    %v1112 = vpack.c.b16 %v1048, %v1048
    %v1113 = vpack.c.b16 %v1049, %v1049
    %v1114 = vpack.c.b16 %v1050, %v1050
    %v1115 = vpack.c.b16 %v1051, %v1051
    %v1116 = vpack.c.b16 %v1052, %v1052
    %v1117 = vpack.c.b16 %v1053, %v1053
    %v1118 = vpack.c.b16 %v1054, %v1054
    %v1119 = vpack.c.b16 %v1055, %v1055
    %v1120 = vpack.c.b16 %v1056, %v1056
    %1185 = vst [vmem:[#allocation2] sm:$0xf] %v1057
    %1186 = vst [vmem:[#allocation2 + $0x4] sm:$0xf] %v1058
    %1187 = vst [vmem:[#allocation2 + $0x8] sm:$0xf] %v1059
    %1188 = vst [vmem:[#allocation2 + $0xc] sm:$0xf] %v1060
    %1189 = vst [vmem:[#allocation2 + $0x10] sm:$0xf] %v1061
    %1190 = vst [vmem:[#allocation2 + $0x14] sm:$0xf] %v1062
    %1191 = vst [vmem:[#allocation2 + $0x18] sm:$0xf] %v1063
    %1192 = vst [vmem:[#allocation2 + $0x1c] sm:$0xf] %v1064
    %1193 = vst [vmem:[#allocation2 + $0x20] sm:$0xf] %v1065
    %1194 = vst [vmem:[#allocation2 + $0x24] sm:$0xf] %v1066
    %1195 = vst [vmem:[#allocation2 + $0x28] sm:$0xf] %v1067
    %1196 = vst [vmem:[#allocation2 + $0x2c] sm:$0xf] %v1068
    %1197 = vst [vmem:[#allocation2 + $0x30] sm:$0xf] %v1069
    %1198 = vst [vmem:[#allocation2 + $0x34] sm:$0xf] %v1070
    %1199 = vst [vmem:[#allocation2 + $0x38] sm:$0xf] %v1071
    %1200 = vst [vmem:[#allocation2 + $0x3c] sm:$0xf] %v1072
    %1201 = vst [vmem:[#allocation2 + $0x40] sm:$0xf] %v1073
    %1202 = vst [vmem:[#allocation2 + $0x44] sm:$0xf] %v1074
    %1203 = vst [vmem:[#allocation2 + $0x48] sm:$0xf] %v1075
    %1204 = vst [vmem:[#allocation2 + $0x4c] sm:$0xf] %v1076
    %1205 = vst [vmem:[#allocation2 + $0x50] sm:$0xf] %v1077
    %1206 = vst [vmem:[#allocation2 + $0x54] sm:$0xf] %v1078
    %1207 = vst [vmem:[#allocation2 + $0x58] sm:$0xf] %v1079
    %1208 = vst [vmem:[#allocation2 + $0x5c] sm:$0xf] %v1080
    %1209 = vst [vmem:[#allocation2 + $0x60] sm:$0xf] %v1081
    %1210 = vst [vmem:[#allocation2 + $0x64] sm:$0xf] %v1082
    %1211 = vst [vmem:[#allocation2 + $0x68] sm:$0xf] %v1083
    %1212 = vst [vmem:[#allocation2 + $0x6c] sm:$0xf] %v1084
    %1213 = vst [vmem:[#allocation2 + $0x70] sm:$0xf] %v1085
    %1214 = vst [vmem:[#allocation2 + $0x74] sm:$0xf] %v1086
    %1215 = vst [vmem:[#allocation2 + $0x78] sm:$0xf] %v1087
    %1216 = vst [vmem:[#allocation2 + $0x7c] sm:$0xf] %v1088
    %1217 = vst [vmem:[#allocation2 + $0x80] sm:$0xf] %v1089
    %1218 = vst [vmem:[#allocation2 + $0x84] sm:$0xf] %v1090
    %1219 = vst [vmem:[#allocation2 + $0x88] sm:$0xf] %v1091
    %1220 = vst [vmem:[#allocation2 + $0x8c] sm:$0xf] %v1092
    %1221 = vst [vmem:[#allocation2 + $0x90] sm:$0xf] %v1093
    %1222 = vst [vmem:[#allocation2 + $0x94] sm:$0xf] %v1094
    %1223 = vst [vmem:[#allocation2 + $0x98] sm:$0xf] %v1095
    %1224 = vst [vmem:[#allocation2 + $0x9c] sm:$0xf] %v1096
    %1225 = vst [vmem:[#allocation2 + $0xa0] sm:$0xf] %v1097
    %1226 = vst [vmem:[#allocation2 + $0xa4] sm:$0xf] %v1098
    %1227 = vst [vmem:[#allocation2 + $0xa8] sm:$0xf] %v1099
    %1228 = vst [vmem:[#allocation2 + $0xac] sm:$0xf] %v1100
    %1229 = vst [vmem:[#allocation2 + $0xb0] sm:$0xf] %v1101
    %1230 = vst [vmem:[#allocation2 + $0xb4] sm:$0xf] %v1102
    %1231 = vst [vmem:[#allocation2 + $0xb8] sm:$0xf] %v1103
    %1232 = vst [vmem:[#allocation2 + $0xbc] sm:$0xf] %v1104
    %1233 = vst [vmem:[#allocation2 + $0xc0] sm:$0xf] %v1105
    %1234 = vst [vmem:[#allocation2 + $0xc4] sm:$0xf] %v1106
    %1235 = vst [vmem:[#allocation2 + $0xc8] sm:$0xf] %v1107
    %1236 = vst [vmem:[#allocation2 + $0xcc] sm:$0xf] %v1108
    %1237 = vst [vmem:[#allocation2 + $0xd0] sm:$0xf] %v1109
    %1238 = vst [vmem:[#allocation2 + $0xd4] sm:$0xf] %v1110
    %1239 = vst [vmem:[#allocation2 + $0xd8] sm:$0xf] %v1111
    %1240 = vst [vmem:[#allocation2 + $0xdc] sm:$0xf] %v1112
    %1241 = vst [vmem:[#allocation2 + $0xe0] sm:$0xf] %v1113
    %1242 = vst [vmem:[#allocation2 + $0xe4] sm:$0xf] %v1114
    %1243 = vst [vmem:[#allocation2 + $0xe8] sm:$0xf] %v1115
    %1244 = vst [vmem:[#allocation2 + $0xec] sm:$0xf] %v1116
    %1245 = vst [vmem:[#allocation2 + $0xf0] sm:$0xf] %v1117
    %1246 = vst [vmem:[#allocation2 + $0xf4] sm:$0xf] %v1118
    %1247 = vst [vmem:[#allocation2 + $0xf8] sm:$0xf] %v1119
    %1248 = vst [vmem:[#allocation2 + $0xfc] sm:$0xf] %v1120
    // Predicated region
    $region14: #{conv2d.1} parent=1 // pred_check
      _
    $region15: #{conv2d.1} parent=1 // pred_check_branch
      %1250 = sbr.rel (0) target = $region17
    $region16: #{conv2d.1} parent=1 // pred_region
      %s1252 = ssub.s32 4096, 4096
      %1253 = vsyncadd [#allocation3], %s1252
      %s1254 = sshll.u32 [#allocation2], 4
      %s1255 = int_to_ptr.vmem [resolvable:$true] %s1254
      %1260 = dma.vmem_to_hbm [thread:$0]  %s1255, 4096, %s3, [#allocation3], 64, 64, 4
    $region17: #{conv2d.1} parent=1 // pred_fallthru
      _
    // Predicated region
    $region18: #{conv2d.1} parent=1 // pred_check
      _
    $region19: #{conv2d.1} parent=1 // pred_check_branch
      %1262 = sbr.rel (0) target = $region21
    $region20: #{conv2d.1} parent=1 // pred_region
      %1263 = dma.done [#allocation3], 4096
    $region21: #{conv2d.1} parent=1 // pred_fallthru
      _
    %1264 = vsyncpa [#allocation3], 1

</llo_original>
